<compile_context>
chip_gen: v6e
topology: v6e:2x2x1
jax: 0.10.0
libtpu: 0.0.40
codegen_flags: <defaults>
</compile_context>

<pallas_src>
import functools

import jax
import jax.numpy as jnp
from jax.experimental import pallas as pl
from jax.experimental.pallas import tpu as pltpu

_MiB = 1024 * 1024


def _round_up(n, m):
    return ((n + m - 1) // m) * m


def _cdiv(a, b):
    return (a + b - 1) // b


def _sublane(dtype):
    """Native sublane multiple for a dtype: 8 for f32, 16 for bf16, 32 for int8."""
    itemsize = jnp.dtype(dtype).itemsize
    return max(8, 32 // max(1, itemsize))


def _vmem_budget_bytes():
    """Generation-aware scoped-VMEM budget (~3/4 of physical capacity)."""
    cap = 64 * _MiB  # conservative fallback (v7x per-TensorCore capacity)
    try:
        info = pltpu.get_tpu_info()
        c = getattr(info, "vmem_capacity_bytes", None)
        if c:
            cap = int(c)
    except Exception:
        pass
    return max(32 * _MiB, min(cap * 3 // 4, cap - 16 * _MiB))


def _block_spec(block_shape, index_map, buffer_count=None):
    """BlockSpec with optional pipeline_mode, degrading gracefully if absent."""
    if buffer_count is not None and hasattr(pl, "Buffered"):
        try:
            return pl.BlockSpec(block_shape, index_map,
                                pipeline_mode=pl.Buffered(buffer_count))
        except (TypeError, ValueError):
            pass
    return pl.BlockSpec(block_shape, index_map)


def _gelu_exact_f32(h):
    # Exact (erf-based) GELU, matching nn.GELU() default.
    return 0.5 * h * (1.0 + jax.lax.erf(h * jnp.float32(0.7071067811865476)))


# ---------------------------------------------------------------------------
# Kernel A: weights fully VMEM-resident (1-D grid over row tiles, no scratch).
# ---------------------------------------------------------------------------
def _vit_mlp_resident_kernel(x_ref, w1_ref, b1_ref, w2_ref, b2_ref, o_ref):
    # x_ref: (tm, D)  w1_ref: (D, H)  b1_ref: (1, H)  w2_ref: (H, D)
    # b2_ref: (1, D)  o_ref: (tm, D)
    h = jnp.dot(x_ref[...], w1_ref[...], preferred_element_type=jnp.float32)
    h = _gelu_exact_f32(h + b1_ref[...].astype(jnp.float32))
    # dropout1: identity in eval mode.
    out = jnp.dot(h.astype(w2_ref.dtype), w2_ref[...],
                  preferred_element_type=jnp.float32)
    # dropout2: identity in eval mode.
    o_ref[...] = (out + b2_ref[...].astype(jnp.float32)).astype(o_ref.dtype)


# ---------------------------------------------------------------------------
# Kernel B: hidden dim streamed as a reduction axis (f32 VMEM accumulator).
# ---------------------------------------------------------------------------
def _vit_mlp_streamed_kernel(x_ref, w1_ref, b1_ref, w2_ref, b2_ref, o_ref,
                             acc_ref):
    # x_ref: (tm, D)   w1_ref: (D, th)   b1_ref: (1, th)
    # w2_ref: (th, D)  b2_ref: (1, D)    o_ref: (tm, D)  acc_ref: (tm, D) f32
    k = pl.program_id(1)

    @pl.when(k == 0)
    def _():
        acc_ref[...] = jnp.zeros_like(acc_ref)

    h = jnp.dot(x_ref[...], w1_ref[...], preferred_element_type=jnp.float32)
    h = _gelu_exact_f32(h + b1_ref[...].astype(jnp.float32))
    # dropout1: identity in eval mode.
    acc_ref[...] += jnp.dot(h.astype(w2_ref.dtype), w2_ref[...],
                            preferred_element_type=jnp.float32)

    @pl.when(k == pl.num_programs(1) - 1)
    def _():
        # dropout2: identity in eval mode.
        o_ref[...] = (acc_ref[...]
                      + b2_ref[...].astype(jnp.float32)).astype(o_ref.dtype)


# ---------------------------------------------------------------------------
# VMEM footprint estimates (bytes) used to pick mode / tile sizes.
# ---------------------------------------------------------------------------
def _resident_vmem_need(tm, D, H, xbytes, wbytes, n_wbuf):
    need = (n_wbuf * (D * H + H * D + H) + D) * wbytes  # weights + biases
    need += 2 * tm * D * xbytes * 2                     # x + out double-buffers
    need += tm * H * (4 + wbytes)                       # h (f32) + cast copy
    need += tm * D * 4                                  # f32 out temp
    return need


def _streamed_vmem_need(tm, th, D, xbytes, wbytes):
    need = (2 * (D * th + th * D + th) + D) * wbytes    # double-buffered slabs
    need += 2 * tm * D * xbytes * 2                     # x + out double-buffers
    need += tm * D * 4                                  # f32 accumulator scratch
    need += tm * th * (4 + wbytes)                      # h (f32) + cast copy
    return need


@functools.partial(jax.jit, static_argnames=("tm", "th"))
def vit_mlp(x, w1, b1, w2, b2, *, tm=512, th=1024):
    """x: (B, S, D); w1: (D, H); b1: (H,); w2: (H, D); b2: (D,).

    Weights are (in_features, out_features), i.e. PyTorch Linear weights
    transposed once at setup time.  Any float dtype (f32 / bf16) is accepted;
    matmul accumulation is always f32.
    """
    B, S, D = x.shape
    H = w1.shape[1]
    M = B * S

    xbytes = jnp.dtype(x.dtype).itemsize
    wbytes = jnp.dtype(w1.dtype).itemsize
    sub = _sublane(x.dtype)
    budget = _vmem_budget_bytes()

    # Row tile: multiple of the dtype-native sublane count, clamped to M.
    tm_eff = min(tm, _round_up(M, sub))
    tm_eff = max(sub, (tm_eff // sub) * sub)
    # Keep >= 2 row tiles for moderate/large M so both v7x TensorCores get work.
    if _cdiv(M, tm_eff) == 1 and M >= 256:
        tm_eff = max(sub, _round_up(_cdiv(M, 2), sub))

    x2 = x.reshape(M, D)
    b2_2 = b2.reshape(1, D)
    compiler_kw = dict(vmem_limit_bytes=int(budget))

    # --- Mode 1: weights fully VMEM-resident (single DMA of W1/W2/biases). ---
    weight_bytes = (D * H + H * D) * wbytes
    buffer_once = weight_bytes > 4 * _MiB and hasattr(pl, "Buffered")
    n_wbuf = 1 if buffer_once else 2

    tm_res = None
    t = tm_eff
    while True:
        if _resident_vmem_need(t, D, H, xbytes, wbytes, n_wbuf) <= budget * 0.85:
            tm_res = t
            break
        if t <= sub:
            break
        t = max(sub, ((t // 2) // sub) * sub)

    if tm_res is not None:
        wbuf = 1 if buffer_once else None
        out2 = pl.pallas_call(
            _vit_mlp_resident_kernel,
            out_shape=jax.ShapeDtypeStruct((M, D), x.dtype),
            grid_spec=pltpu.PrefetchScalarGridSpec(
                num_scalar_prefetch=0,
                grid=(_cdiv(M, tm_res),),
                in_specs=[
                    pl.BlockSpec((tm_res, D), lambda i: (i, 0)),   # x row tile
                    _block_spec((D, H), lambda i: (0, 0), wbuf),   # W1 (resident)
                    _block_spec((1, H), lambda i: (0, 0), wbuf),   # b1 (resident)
                    _block_spec((H, D), lambda i: (0, 0), wbuf),   # W2 (resident)
                    _block_spec((1, D), lambda i: (0, 0), wbuf),   # b2 (resident)
                ],
                out_specs=pl.BlockSpec((tm_res, D), lambda i: (i, 0)),
            ),
            compiler_params=pltpu.CompilerParams(
                dimension_semantics=("parallel",), **compiler_kw),
        )(x2, w1, b1.reshape(1, H), w2, b2_2)
        return out2.reshape(B, S, D)

    # --- Mode 2: hidden dim streamed as a reduction axis (large weights). ----
    th_eff = min(_round_up(th, 128), _round_up(H, 128))
    while (th_eff > 128 and
           _streamed_vmem_need(tm_eff, th_eff, D, xbytes, wbytes) > budget * 0.85):
        th_eff = max(128, ((th_eff // 2) // 128) * 128)
    while (tm_eff > sub and
           _streamed_vmem_need(tm_eff, th_eff, D, xbytes, wbytes) > budget * 0.85):
        tm_eff = max(sub, ((tm_eff // 2) // sub) * sub)

    H_pad = _round_up(H, th_eff)
    w1p, b1p, w2p = w1, b1, w2
    if H_pad != H:
        # Zero-padded hidden units contribute exactly zero to the output
        # (their W2 rows are zero), so this is numerically exact.
        w1p = jnp.pad(w1, ((0, 0), (0, H_pad - H)))
        b1p = jnp.pad(b1, ((0, H_pad - H),))
        w2p = jnp.pad(w2, ((0, H_pad - H), (0, 0)))

    out2 = pl.pallas_call(
        _vit_mlp_streamed_kernel,
        out_shape=jax.ShapeDtypeStruct((M, D), x.dtype),
        grid_spec=pltpu.PrefetchScalarGridSpec(
            num_scalar_prefetch=0,
            grid=(_cdiv(M, tm_eff), H_pad // th_eff),
            in_specs=[
                pl.BlockSpec((tm_eff, D), lambda i, k: (i, 0)),    # x row tile
                pl.BlockSpec((D, th_eff), lambda i, k: (0, k)),    # W1 hidden slab
                pl.BlockSpec((1, th_eff), lambda i, k: (0, k)),    # b1 slab
                pl.BlockSpec((th_eff, D), lambda i, k: (k, 0)),    # W2 hidden slab
                pl.BlockSpec((1, D), lambda i, k: (0, 0)),         # b2
            ],
            out_specs=pl.BlockSpec((tm_eff, D), lambda i, k: (i, 0)),
            scratch_shapes=[pltpu.VMEM((tm_eff, D), jnp.float32)],
        ),
        compiler_params=pltpu.CompilerParams(
            dimension_semantics=("parallel", "arbitrary"), **compiler_kw),
    )(x2, w1p, b1p.reshape(1, H_pad), w2p, b2_2)
    return out2.reshape(B, S, D)


def init_vit_mlp_params(key, mlp_num_hiddens, mlp_num_outputs, dtype=jnp.float32):
    """Deterministic init mimicking PyTorch Linear (uniform +-1/sqrt(fan_in)).

    Returns weights already transposed to (in_features, out_features)."""
    k1, k2, k3, k4 = jax.random.split(key, 4)
    D, H = mlp_num_outputs, mlp_num_hiddens
    bound1 = 1.0 / jnp.sqrt(jnp.float32(D))
    bound2 = 1.0 / jnp.sqrt(jnp.float32(H))
    w1 = jax.random.uniform(k1, (D, H), dtype, -bound1, bound1)   # dense1.weight.T
    b1 = jax.random.uniform(k2, (H,), dtype, -bound1, bound1)
    w2 = jax.random.uniform(k3, (H, D), dtype, -bound2, bound2)   # dense2.weight.T
    b2 = jax.random.uniform(k4, (D,), dtype, -bound2, bound2)
    return w1, b1, w2, b2


def _reference(x, w1, b1, w2, b2):
    """Pure-JAX reference of the same forward pass (eval-mode dropout)."""
    xf = x.astype(jnp.float32)
    h = xf @ w1.astype(jnp.float32) + b1.astype(jnp.float32)
    h = 0.5 * h * (1.0 + jax.lax.erf(h * 0.7071067811865476))
    return (h @ w2.astype(jnp.float32) + b2.astype(jnp.float32)).astype(jnp.float32)


if __name__ == "__main__":
    # Small shapes implied by the forward: x is (B, S, mlp_num_outputs).
    B, S = 2, 8
    mlp_num_outputs = 32
    mlp_num_hiddens = 64

    key = jax.random.PRNGKey(0)
    kx, kp = jax.random.split(key)
    x = jax.random.normal(kx, (B, S, mlp_num_outputs), jnp.float32)
    w1, b1, w2, b2 = init_vit_mlp_params(kp, mlp_num_hiddens, mlp_num_outputs)

    # f32 path (bit-comparable to the erf-GELU reference).
    out = jax.block_until_ready(vit_mlp(x, w1, b1, w2, b2))
    ref = _reference(x, w1, b1, w2, b2)
    assert out.shape == (B, S, mlp_num_outputs)
    assert jnp.allclose(out, ref, atol=1e-5, rtol=1e-5)

    # bf16 path: MXU-native operands, f32 accumulation inside the kernel.
    xb = x.astype(jnp.bfloat16)
    w1b, b1b, w2b, b2b = (t.astype(jnp.bfloat16) for t in (w1, b1, w2, b2))
    out_bf = jax.block_until_ready(vit_mlp(xb, w1b, b1b, w2b, b2b))
    assert out_bf.shape == (B, S, mlp_num_outputs)
    assert jnp.allclose(out_bf.astype(jnp.float32), ref, atol=1e-1, rtol=1e-1)

    print("KERNEL_OK")
</pallas_src>

<mosaic_0001>
module attributes {stable_mosaic.version = 11 : i64} {
  func.func @_vit_mlp_resident_kernel(%arg0: i32, %arg1: memref<16x32xf32, #tpu.memory_space<vmem>>, %arg2: memref<32x64xf32, #tpu.memory_space<vmem>>, %arg3: memref<1x64xf32, #tpu.memory_space<vmem>>, %arg4: memref<64x32xf32, #tpu.memory_space<vmem>>, %arg5: memref<1x32xf32, #tpu.memory_space<vmem>>, %arg6: memref<16x32xf32, #tpu.memory_space<vmem>>) attributes {dimension_semantics = [#tpu.dimension_semantics<parallel>], iteration_bounds = array<i64: 1>, scalar_prefetch = 0 : i64, scratch_operands = 0 : i64, tpu.core_type = #tpu.core_type<tc>, window_params = [{transform_indices = @transform_0, window_bounds = array<i64: 16, 32>}, {pipeline_mode = #tpu.pipeline_mode<synchronous>, transform_indices = @transform_1, window_bounds = array<i64: 32, 64>}, {pipeline_mode = #tpu.pipeline_mode<synchronous>, transform_indices = @transform_2, window_bounds = array<i64: 1, 64>}, {pipeline_mode = #tpu.pipeline_mode<synchronous>, transform_indices = @transform_3, window_bounds = array<i64: 64, 32>}, {pipeline_mode = #tpu.pipeline_mode<synchronous>, transform_indices = @transform_4, window_bounds = array<i64: 1, 32>}, {transform_indices = @transform_5, window_bounds = array<i64: 16, 32>}]} {
    %c0 = arith.constant 0 : index
    %c0_0 = arith.constant 0 : index
    %0 = vector.load %arg1[%c0, %c0_0] : memref<16x32xf32, #tpu.memory_space<vmem>>, vector<16x32xf32>
    %c0_1 = arith.constant 0 : index
    %c0_2 = arith.constant 0 : index
    %1 = vector.load %arg2[%c0_1, %c0_2] : memref<32x64xf32, #tpu.memory_space<vmem>>, vector<32x64xf32>
    %cst = arith.constant dense<0.000000e+00> : vector<16x64xf32>
    %2 = tpu.matmul %0, %1, %cst {dimension_numbers = #tpu.dot_dimension_numbers<[1], [0], [0], [1], [0, 0, 1, 1], [], []>} : vector<16x32xf32>, vector<32x64xf32>, vector<16x64xf32> -> vector<16x64xf32>
    %c0_3 = arith.constant 0 : index
    %c0_4 = arith.constant 0 : index
    %3 = vector.load %arg3[%c0_3, %c0_4] : memref<1x64xf32, #tpu.memory_space<vmem>>, vector<1x64xf32>
    %4 = vector.broadcast %3 : vector<1x64xf32> to vector<16x64xf32>
    %5 = arith.addf %2, %4 : vector<16x64xf32>
    %cst_5 = arith.constant 5.000000e-01 : f32
    %6 = vector.broadcast %cst_5 : f32 to vector<16x64xf32>
    %7 = arith.mulf %6, %5 : vector<16x64xf32>
    %cst_6 = arith.constant 0.707106769 : f32
    %8 = vector.broadcast %cst_6 : f32 to vector<16x64xf32>
    %9 = arith.mulf %5, %8 : vector<16x64xf32>
    %10 = math.erf %9 : vector<16x64xf32>
    %cst_7 = arith.constant 1.000000e+00 : f32
    %11 = vector.broadcast %cst_7 : f32 to vector<16x64xf32>
    %12 = arith.addf %11, %10 : vector<16x64xf32>
    %13 = arith.mulf %7, %12 : vector<16x64xf32>
    %c0_8 = arith.constant 0 : index
    %c0_9 = arith.constant 0 : index
    %14 = vector.load %arg4[%c0_8, %c0_9] : memref<64x32xf32, #tpu.memory_space<vmem>>, vector<64x32xf32>
    %cst_10 = arith.constant dense<0.000000e+00> : vector<16x32xf32>
    %15 = tpu.matmul %13, %14, %cst_10 {dimension_numbers = #tpu.dot_dimension_numbers<[1], [0], [0], [1], [0, 0, 1, 1], [], []>} : vector<16x64xf32>, vector<64x32xf32>, vector<16x32xf32> -> vector<16x32xf32>
    %c0_11 = arith.constant 0 : index
    %c0_12 = arith.constant 0 : index
    %16 = vector.load %arg5[%c0_11, %c0_12] : memref<1x32xf32, #tpu.memory_space<vmem>>, vector<1x32xf32>
    %17 = vector.broadcast %16 : vector<1x32xf32> to vector<16x32xf32>
    %18 = arith.addf %15, %17 : vector<16x32xf32>
    %c0_13 = arith.constant 0 : index
    %c0_14 = arith.constant 0 : index
    %19 = vector.load %arg6[%c0_13, %c0_14] : memref<16x32xf32, #tpu.memory_space<vmem>>, vector<16x32xf32>
    tpu.vector_store %arg6[%c0_13, %c0_14], %18 {strides = array<i32>} : memref<16x32xf32, #tpu.memory_space<vmem>>, vector<16x32xf32>,
    return
  }
  func.func @transform_0(%arg0: i32) -> (i32, i32) {
    %c0_i32 = arith.constant 0 : i32
    %c0_i32_0 = arith.constant 0 : i32
    return %arg0, %c0_i32 : i32, i32
  }
  func.func @transform_1(%arg0: i32) -> (i32, i32) {
    %c0_i32 = arith.constant 0 : i32
    %c0_i32_0 = arith.constant 0 : i32
    %c0_i32_1 = arith.constant 0 : i32
    return %c0_i32, %c0_i32_0 : i32, i32
  }
  func.func @transform_2(%arg0: i32) -> (i32, i32) {
    %c0_i32 = arith.constant 0 : i32
    %c0_i32_0 = arith.constant 0 : i32
    %c0_i32_1 = arith.constant 0 : i32
    return %c0_i32, %c0_i32_0 : i32, i32
  }
  func.func @transform_3(%arg0: i32) -> (i32, i32) {
    %c0_i32 = arith.constant 0 : i32
    %c0_i32_0 = arith.constant 0 : i32
    %c0_i32_1 = arith.constant 0 : i32
    return %c0_i32, %c0_i32_0 : i32, i32
  }
  func.func @transform_4(%arg0: i32) -> (i32, i32) {
    %c0_i32 = arith.constant 0 : i32
    %c0_i32_0 = arith.constant 0 : i32
    %c0_i32_1 = arith.constant 0 : i32
    return %c0_i32, %c0_i32_0 : i32, i32
  }
  func.func @transform_5(%arg0: i32) -> (i32, i32) {
    %c0_i32 = arith.constant 0 : i32
    %c0_i32_0 = arith.constant 0 : i32
    return %arg0, %c0_i32 : i32, i32
  }
}

</mosaic_0001>

<llo_original>
// kernel: vit_mlp.1
$region0: #{vit_mlp.1}
  #allocation0 [shape = 'u32[]', space=smem, size = 0x4, offset = 0x4, fixed_abs, tag = 'smem constant byte address 0x4 - core index']
  #allocation1 [shape = 'u32[144,128]{1,0:T(1,128)}', space=vmem, size = 0x12000, scoped, tag = 'internal scratch']
  %s0 = inlined_call_operand.vmem [shape: f32[16,32], index: 0, kind: input, shape index: {}]
  %s1 = inlined_call_operand.vmem [shape: f32[32,64], index: 1, kind: input, shape index: {}]
  %s2 = inlined_call_operand.vmem [shape: f32[1,64], index: 2, kind: input, shape index: {}]
  %s3 = inlined_call_operand.vmem [shape: f32[64,32], index: 3, kind: input, shape index: {}]
  %s4 = inlined_call_operand.vmem [shape: f32[1,32], index: 4, kind: input, shape index: {}]
  %s5 = inlined_call_operand.hbm [shape: f32[16,32], index: 5, kind: output, shape index: {}]
  %s6 = sld [smem:[#allocation0]]
  $region30: #{vit_mlp.1} parent=0
    _
  %s8 = ssub.s32 1, %s6
  %s9 = scalar_select 0, %s8, %s6
  $region1: #{vit_mlp.1} parent=0
    #allocation2 [shape = 'u8[8192]{0}', space=vmem, size = 0x2000, scoped, tag = 'output window, operand 0, single buffered']
    #allocation3 [shape = 's32[1]{0}', space=sflag, size = 0x4, scoped, tag = 'scoped memory for vit_mlp.1']
    %10 = vsyncpa [#allocation3], 0
    // Predicated region
    $region2: #{vit_mlp.1} parent=1 // pred_check
      _
    $region3: #{vit_mlp.1} parent=1 // pred_check_branch
      %12 = sbr.rel (0) target = $region5
    $region4: #{vit_mlp.1} parent=1 // pred_region
      _
    $region5: #{vit_mlp.1} parent=1 // pred_fallthru
      _
    // Predicated region
    $region6: #{vit_mlp.1} parent=1 // pred_check
      _
    $region7: #{vit_mlp.1} parent=1 // pred_check_branch
      %14 = sbr.rel (0) target = $region9
    $region8: #{vit_mlp.1} parent=1 // pred_region
      _
    $region9: #{vit_mlp.1} parent=1 // pred_fallthru
      _
    // Predicated region
    $region10: #{vit_mlp.1} parent=1 // pred_check
      _
    $region11: #{vit_mlp.1} parent=1 // pred_check_branch
      %16 = sbr.rel (0) target = $region13
    $region12: #{vit_mlp.1} parent=1 // pred_region
      _
    $region13: #{vit_mlp.1} parent=1 // pred_fallthru
      _
    // Predicated region
    $region14: #{vit_mlp.1} parent=1 // pred_check
      _
    $region15: #{vit_mlp.1} parent=1 // pred_check_branch
      %18 = sbr.rel (0) target = $region17
    $region16: #{vit_mlp.1} parent=1 // pred_region
      _
    $region17: #{vit_mlp.1} parent=1 // pred_fallthru
      _
    // Predicated region
    $region18: #{vit_mlp.1} parent=1 // pred_check
      _
    $region19: #{vit_mlp.1} parent=1 // pred_check_branch
      %20 = sbr.rel (0) target = $region21
    $region20: #{vit_mlp.1} parent=1 // pred_region
      _
    $region21: #{vit_mlp.1} parent=1 // pred_fallthru
      _
    %v21 = vld [vmem:[%s0] sm:$0xff]
    %v22 = vld [vmem:[%s0 + $0x8] sm:$0xff]
    %v23 = vld [vmem:[%s1] sm:$0xff]
    %v24 = vld [vmem:[%s1 + $0x8] sm:$0xff]
    %v25 = vld [vmem:[%s1 + $0x10] sm:$0xff]
    %v26 = vld [vmem:[%s1 + $0x18] sm:$0xff]
    %v27 = vld [vmem:[%s2] sm:$0x1]
    %v29 = vlaneseq
    %v30 = vshrl.u32 %v29, 7
    %v31 = vsub.s32 0, %v30
    %v32 = vrot.slane %v27, %v31
    %vm34 = vcmask 261120
    %v36 = vsel %vm34, %v21, 0
    %v39 = vsel %vm34, %v22, 0
    %41 = vmatprep.subr.mxu0 0.0
    %42 = vmatpush1.msra.mxu0 0.0
    %43 = vmatprep.subr.mxu0 0.0
    %44 = vmatpush1.msra.mxu0 0.0
    %45 = vmatprep.subr.mxu0 0.0
    %46 = vmatpush1.msra.mxu0 0.0
    %47 = vmatprep.subr.mxu0 0.0
    %48 = vmatpush1.msra.mxu0 0.0
    %49 = vmatprep.subr.mxu0 0.0
    %50 = vmatpush1.msra.mxu0 0.0
    %51 = vmatprep.subr.mxu0 0.0
    %52 = vmatpush1.msra.mxu0 0.0
    %53 = vmatprep.subr.mxu0 0.0
    %54 = vmatpush1.msra.mxu0 0.0
    %55 = vmatprep.subr.mxu0 0.0
    %56 = vmatpush1.msra.mxu0 0.0
    %57 = vmatprep.subr.mxu0 0.0
    %58 = vmatpush1.msra.mxu0 0.0
    %59 = vmatprep.subr.mxu0 0.0
    %60 = vmatpush1.msra.mxu0 0.0
    %61 = vmatprep.subr.mxu0 0.0
    %62 = vmatpush1.msra.mxu0 0.0
    %63 = vmatprep.subr.mxu0 0.0
    %64 = vmatpush1.msra.mxu0 0.0
    %65 = vmatprep.subr.mxu0 0.0
    %66 = vmatpush1.msra.mxu0 %v26
    %67 = vmatprep.subr.mxu0 0.0
    %68 = vmatpush1.msra.mxu0 %v25
    %69 = vmatprep.subr.mxu0 0.0
    %70 = vmatpush1.msra.mxu0 %v24
    %71 = vmatprep.subr.mxu0 0.0
    %72 = vmatpush1.msra.mxu0 %v23
    %73 = vmatprep.subr.mxu0 0.0
    %74 = vmatpush2.msra.mxu0 0.0
    %75 = vmatprep.subr.mxu0 0.0
    %76 = vmatpush2.msra.mxu0 0.0
    %77 = vmatprep.subr.mxu0 0.0
    %78 = vmatpush2.msra.mxu0 0.0
    %79 = vmatprep.subr.mxu0 0.0
    %80 = vmatpush2.msra.mxu0 0.0
    %81 = vmatprep.subr.mxu0 0.0
    %82 = vmatpush2.msra.mxu0 0.0
    %83 = vmatprep.subr.mxu0 0.0
    %84 = vmatpush2.msra.mxu0 0.0
    %85 = vmatprep.subr.mxu0 0.0
    %86 = vmatpush2.msra.mxu0 0.0
    %87 = vmatprep.subr.mxu0 0.0
    %88 = vmatpush2.msra.mxu0 0.0
    %89 = vmatprep.subr.mxu0 0.0
    %90 = vmatpush2.msra.mxu0 0.0
    %91 = vmatprep.subr.mxu0 0.0
    %92 = vmatpush2.msra.mxu0 0.0
    %93 = vmatprep.subr.mxu0 0.0
    %94 = vmatpush2.msra.mxu0 0.0
    %95 = vmatprep.subr.mxu0 0.0
    %96 = vmatpush2.msra.mxu0 0.0
    %97 = vmatprep.subr.mxu0 0.0
    %98 = vmatpush2.msra.mxu0 0.0
    %99 = vmatprep.subr.mxu0 0.0
    %100 = vmatpush2.msra.mxu0 0.0
    %101 = vmatprep.subr.mxu0 0.0
    %102 = vmatpush2.msra.mxu0 0.0
    %103 = vmatprep.subr.mxu0 0.0
    %104 = vmatpush2.msra.mxu0 0.0
    %105 = vmatprep.mubr.f32.mxu0 0.0
    %106 = vmatmul.mubr.f32.gmra.mxu0 %v36
    %v107 = vpop.f32.mrf.mxu0
    %v108 = vadd.f32 %v32, %v107
    %v109 = vpop.f32.mrf.mxu0
    %110 = vmatprep.mubr.f32.mxu0 0.0
    %111 = vmatmul.mubr.f32.gmra.mxu0 %v39
    %v112 = vpop.f32.mrf.mxu0
    %v113 = vadd.f32 %v32, %v112
    %v114 = vpop.f32.mrf.mxu0
    %115 = vdwg.mxu0
    %v116 = vmul.f32 %v108, 0.5
    %v117 = vmul.f32 %v113, 0.5
    %v118 = vmul.f32 %v108, 0.70710677
    %v119 = vmul.f32 %v113, 0.70710677
    %v120 = verf.f32.pop %v118
    %v121 = verf.f32.pop %v119
    %v122 = vadd.f32 %v120, 1.0
    %v123 = vadd.f32 %v121, 1.0
    %v124 = vmul.f32 %v116, %v122
    %v125 = vmul.f32 %v117, %v123
    %v126 = vld [vmem:[%s3] sm:$0xff]
    %v127 = vld [vmem:[%s3 + $0x8] sm:$0xff]
    %v128 = vld [vmem:[%s3 + $0x10] sm:$0xff]
    %v129 = vld [vmem:[%s3 + $0x18] sm:$0xff]
    %v130 = vld [vmem:[%s3 + $0x20] sm:$0xff]
    %v131 = vld [vmem:[%s3 + $0x28] sm:$0xff]
    %v132 = vld [vmem:[%s3 + $0x30] sm:$0xff]
    %v133 = vld [vmem:[%s3 + $0x38] sm:$0xff]
    %v134 = vld [vmem:[%s4] sm:$0x1]
    %v136 = vlaneseq
    %v137 = vshrl.u32 %v136, 7
    %v138 = vsub.s32 0, %v137
    %v139 = vrot.slane %v134, %v138
    %vm141 = vcmask 523264
    %v143 = vsel %vm141, %v124, 0
    %v146 = vsel %vm141, %v125, 0
    %148 = vmatprep.subr.mxu0 0.0
    %149 = vmatpush1.msra.mxu0 0.0
    %150 = vmatprep.subr.mxu0 0.0
    %151 = vmatpush1.msra.mxu0 0.0
    %152 = vmatprep.subr.mxu0 0.0
    %153 = vmatpush1.msra.mxu0 0.0
    %154 = vmatprep.subr.mxu0 0.0
    %155 = vmatpush1.msra.mxu0 0.0
    %156 = vmatprep.subr.mxu0 0.0
    %157 = vmatpush1.msra.mxu0 0.0
    %158 = vmatprep.subr.mxu0 0.0
    %159 = vmatpush1.msra.mxu0 0.0
    %160 = vmatprep.subr.mxu0 0.0
    %161 = vmatpush1.msra.mxu0 0.0
    %162 = vmatprep.subr.mxu0 0.0
    %163 = vmatpush1.msra.mxu0 0.0
    %164 = vmatprep.subr.mxu0 0.0
    %165 = vmatpush1.msra.mxu0 %v133
    %166 = vmatprep.subr.mxu0 0.0
    %167 = vmatpush1.msra.mxu0 %v132
    %168 = vmatprep.subr.mxu0 0.0
    %169 = vmatpush1.msra.mxu0 %v131
    %170 = vmatprep.subr.mxu0 0.0
    %171 = vmatpush1.msra.mxu0 %v130
    %172 = vmatprep.subr.mxu0 0.0
    %173 = vmatpush1.msra.mxu0 %v129
    %174 = vmatprep.subr.mxu0 0.0
    %175 = vmatpush1.msra.mxu0 %v128
    %176 = vmatprep.subr.mxu0 0.0
    %177 = vmatpush1.msra.mxu0 %v127
    %178 = vmatprep.subr.mxu0 0.0
    %179 = vmatpush1.msra.mxu0 %v126
    %180 = vmatprep.subr.mxu0 0.0
    %181 = vmatpush2.msra.mxu0 0.0
    %182 = vmatprep.subr.mxu0 0.0
    %183 = vmatpush2.msra.mxu0 0.0
    %184 = vmatprep.subr.mxu0 0.0
    %185 = vmatpush2.msra.mxu0 0.0
    %186 = vmatprep.subr.mxu0 0.0
    %187 = vmatpush2.msra.mxu0 0.0
    %188 = vmatprep.subr.mxu0 0.0
    %189 = vmatpush2.msra.mxu0 0.0
    %190 = vmatprep.subr.mxu0 0.0
    %191 = vmatpush2.msra.mxu0 0.0
    %192 = vmatprep.subr.mxu0 0.0
    %193 = vmatpush2.msra.mxu0 0.0
    %194 = vmatprep.subr.mxu0 0.0
    %195 = vmatpush2.msra.mxu0 0.0
    %196 = vmatprep.subr.mxu0 0.0
    %197 = vmatpush2.msra.mxu0 0.0
    %198 = vmatprep.subr.mxu0 0.0
    %199 = vmatpush2.msra.mxu0 0.0
    %200 = vmatprep.subr.mxu0 0.0
    %201 = vmatpush2.msra.mxu0 0.0
    %202 = vmatprep.subr.mxu0 0.0
    %203 = vmatpush2.msra.mxu0 0.0
    %204 = vmatprep.subr.mxu0 0.0
    %205 = vmatpush2.msra.mxu0 0.0
    %206 = vmatprep.subr.mxu0 0.0
    %207 = vmatpush2.msra.mxu0 0.0
    %208 = vmatprep.subr.mxu0 0.0
    %209 = vmatpush2.msra.mxu0 0.0
    %210 = vmatprep.subr.mxu0 0.0
    %211 = vmatpush2.msra.mxu0 0.0
    %212 = vmatprep.mubr.f32.mxu0 0.0
    %213 = vmatmul.mubr.f32.gmra.mxu0 %v143
    %v214 = vpop.f32.mrf.mxu0
    %v215 = vadd.f32 %v139, %v214
    %v216 = vpop.f32.mrf.mxu0
    %217 = vmatprep.mubr.f32.mxu0 0.0
    %218 = vmatmul.mubr.f32.gmra.mxu0 %v146
    %v219 = vpop.f32.mrf.mxu0
    %v220 = vadd.f32 %v139, %v219
    %v221 = vpop.f32.mrf.mxu0
    %222 = vdwg.mxu0
    %223 = vst.msk [vmem:[#allocation2] sm:$0xff] %vm34, %v215
    %224 = vst.msk [vmem:[#allocation2 + $0x8] sm:$0xff] %vm34, %v220
    // Predicated region
    $region22: #{vit_mlp.1} parent=1 // pred_check
      _
    $region23: #{vit_mlp.1} parent=1 // pred_check_branch
      %226 = sbr.rel (0) target = $region25
    $region24: #{vit_mlp.1} parent=1 // pred_region
      %s228 = ssub.s32 256, 256
      %229 = vsyncadd [#allocation3], %s228
      %s230 = sshll.u32 [#allocation2], 4
      %s231 = int_to_ptr.vmem [resolvable:$true] %s230
      %236 = dma.vmem_to_hbm [thread:$0]  %s231, 256, %s5, [#allocation3], 128, 128, 8
    $region25: #{vit_mlp.1} parent=1 // pred_fallthru
      _
    // Predicated region
    $region26: #{vit_mlp.1} parent=1 // pred_check
      _
    $region27: #{vit_mlp.1} parent=1 // pred_check_branch
      %238 = sbr.rel (0) target = $region29
    $region28: #{vit_mlp.1} parent=1 // pred_region
      %239 = dma.done [#allocation3], 256
    $region29: #{vit_mlp.1} parent=1 // pred_fallthru
      _
    %240 = vsyncpa [#allocation3], 1

</llo_original>
